<compile_context>
chip_gen: v6e
topology: v6e:2x2x1
jax: 0.10.0
libtpu: 0.0.40
codegen_flags: <defaults>
</compile_context>

<pallas_src>
import functools

import jax
import jax.numpy as jnp
import numpy as np
from jax.experimental import pallas as pl
from jax.experimental.pallas import tpu as pltpu


def _round_up(n: int, m: int) -> int:
    return ((n + m - 1) // m) * m


def _pad2d(a, shape):
    pads = [(0, s - d) for s, d in zip(shape, a.shape)]
    if all(p == (0, 0) for p in pads):
        return a
    return jnp.pad(a, pads)  # zero padding


def _mlp_adapter_kernel(x_ref, wp_ref, wg_ref, bp_ref, bg_ref, w2_ref, b2_ref,
                        g_ref, o_ref, acc_ref, *, eps: float, inv_d: float):
    """One (TN, Dp) token tile x one (TH) hidden slice of the fused adapter."""
    k = pl.program_id(1)

    @pl.when(k == 0)
    def _():
        acc_ref[...] = jnp.zeros_like(acc_ref)

    x = x_ref[...]                                          # (TN, Dp), native dtype

    # SwishGLU on this hidden slice: proj/gate dots feed the MXU in native dtype,
    # accumulate in f32.
    proj = jnp.dot(x, wp_ref[...], preferred_element_type=jnp.float32) + bp_ref[...]
    gate = jnp.dot(x, wg_ref[...], preferred_element_type=jnp.float32) + bg_ref[...]
    y = proj * (gate * jax.nn.sigmoid(gate))                # proj * SiLU(gate), f32

    # Partial output projection for this hidden slice, accumulated over k.
    acc_ref[...] += jnp.dot(y.astype(w2_ref.dtype), w2_ref[...],
                            preferred_element_type=jnp.float32)

    @pl.when(k == pl.num_programs(1) - 1)
    def _():
        # Residual + RMSNorm tail (f32).  Padded embed columns are exactly zero,
        # so summing over Dp and scaling by 1/D_true equals the true mean.
        r = x.astype(jnp.float32) + acc_ref[...] + b2_ref[...]
        ms = jnp.sum(r * r, axis=-1, keepdims=True) * inv_d
        inv = jax.lax.rsqrt(jnp.maximum(ms, eps * eps))     # == 1/max(sqrt(ms), eps)
        o_ref[...] = (r * inv * g_ref[...]).astype(o_ref.dtype)


def mlp_adapter_forward(x, params, *, eps: float = 1e-8, tn: int = 256,
                        th: int = 1024):
    """x: (B, n_latents, D).  Returns squeeze(dim=1) of the adapted latents."""
    B, L, D = x.shape
    N = B * L

    w1, b1, w2, b2, g = params          # w1:(D,2H) b1:(1,2H) w2:(H,D) b2:(1,D) g:(1,D)
    H = w1.shape[1] // 2

    # Split the fused SwishGLU projection into proj / gate halves (done once, in XLA).
    wp, wg = w1[:, :H], w1[:, H:]
    bp, bg = b1[:, :H], b1[:, H:]

    # Lane/sublane-aligned, zero-padded shapes.
    Dp = _round_up(D, 128)
    TN = min(tn, _round_up(N, 8))
    Np = _round_up(N, TN)
    TH = min(th, _round_up(H, 128))
    Hp = _round_up(H, TH)

    x2d = _pad2d(x.reshape(N, D), (Np, Dp))
    wp_p = _pad2d(wp, (Dp, TH * (Hp // TH)))
    wg_p = _pad2d(wg, (Dp, Hp))
    bp_p = _pad2d(bp, (1, Hp))
    bg_p = _pad2d(bg, (1, Hp))
    w2_p = _pad2d(w2, (Hp, Dp))
    b2_p = _pad2d(b2, (1, Dp))
    g_p = _pad2d(g, (1, Dp))

    kernel = functools.partial(_mlp_adapter_kernel, eps=eps, inv_d=1.0 / D)

    # Explicit VMEM budget from the chosen tiles (double-buffered weight slices +
    # x/out tiles + accumulator + f32 intermediates), capped so it is v7x-safe.
    a_item = jnp.dtype(x.dtype).itemsize
    w_item = jnp.dtype(w1.dtype).itemsize
    step_weights = (2 * Dp * TH + TH * Dp) * w_item
    io_tiles = 2 * TN * Dp * a_item
    working = 2 * step_weights + 2 * io_tiles + TN * Dp * 4 + 3 * TN * TH * 4
    vmem_limit = int(max(32 * 2**20, min(working + (8 << 20), 56 * 2**20)))

    grid = (Np // TN, Hp // TH)

    out2d = pl.pallas_call(
        kernel,
        out_shape=jax.ShapeDtypeStruct((Np, Dp), x.dtype),
        grid_spec=pltpu.PrefetchScalarGridSpec(
            num_scalar_prefetch=0,
            grid=grid,
            in_specs=[
                pl.BlockSpec((TN, Dp), lambda i, k: (i, 0)),   # x tile (pipelined)
                pl.BlockSpec((Dp, TH), lambda i, k: (0, k)),   # W_proj slice
                pl.BlockSpec((Dp, TH), lambda i, k: (0, k)),   # W_gate slice
                pl.BlockSpec((1, TH), lambda i, k: (0, k)),    # b_proj slice
                pl.BlockSpec((1, TH), lambda i, k: (0, k)),    # b_gate slice
                pl.BlockSpec((TH, Dp), lambda i, k: (k, 0)),   # W2 slice
                pl.BlockSpec((1, Dp), lambda i, k: (0, 0)),    # b2 (resident)
                pl.BlockSpec((1, Dp), lambda i, k: (0, 0)),    # g  (resident)
            ],
            out_specs=pl.BlockSpec((TN, Dp), lambda i, k: (i, 0)),
            scratch_shapes=[pltpu.VMEM((TN, Dp), jnp.float32)],
        ),
        compiler_params=pltpu.CompilerParams(
            dimension_semantics=("parallel", "arbitrary"),
            vmem_limit_bytes=vmem_limit,
        ),
    )(x2d, wp_p, wg_p, bp_p, bg_p, w2_p, b2_p, g_p)

    out = out2d[:N, :D].reshape(B, L, D)
    return out.reshape(B, D) if L == 1 else out             # torch .squeeze(dim=1)


def _reference(x, params, eps=1e-8):
    """Pure-JAX reference matching the PyTorch module."""
    w1, b1, w2, b2, g = params
    B, L, D = x.shape
    xf = x.astype(jnp.float32)
    h = xf @ w1 + b1[0]
    hid = h.shape[-1] // 2
    proj, gate = h[..., :hid], h[..., hid:]
    y = proj * jax.nn.silu(gate)
    z = y @ w2 + b2[0]
    r = xf + z
    rms = jnp.sqrt(jnp.mean(r * r, axis=-1, keepdims=True))
    out = r / jnp.maximum(rms, eps) * g[0]
    out = out.astype(x.dtype)
    return out.reshape(B, D) if L == 1 else out


def init_params(key, embed_dim, mlp_ratio=4.0, dtype=jnp.float32):
    hidden = int(mlp_ratio * embed_dim)
    k1, k2, k3, k4 = jax.random.split(key, 4)
    # nn.Linear(D, 2H): weight (2H, D) -> store transposed (D, 2H) for x @ W.
    w1 = jax.random.normal(k1, (embed_dim, 2 * hidden), dtype) * 0.02
    b1 = jax.random.normal(k2, (1, 2 * hidden), dtype) * 0.01
    # nn.Linear(H, D): weight (D, H) -> store transposed (H, D).
    w2 = jax.random.normal(k3, (hidden, embed_dim), dtype) * 0.02
    b2 = jax.random.normal(k4, (1, embed_dim), dtype) * 0.01
    g = jnp.ones((1, embed_dim), dtype)                     # RMSNorm gain init = 1
    return (w1, b1, w2, b2, g)


if __name__ == "__main__":
    # Small shapes consistent with the module: batch=2, n_latents=1, embed_dim=32.
    B, L, D = 2, 1, 32
    key = jax.random.PRNGKey(0)
    kx, kp = jax.random.split(key)
    x = jax.random.normal(kx, (B, L, D), jnp.float32)
    params = init_params(kp, D, mlp_ratio=4.0)

    out = mlp_adapter_forward(x, params)
    out = jax.block_until_ready(out)

    ref = _reference(x, params)
    np.testing.assert_allclose(np.asarray(out), np.asarray(ref), rtol=1e-5, atol=1e-5)
    assert out.shape == (B, D)
    print("KERNEL_OK")
</pallas_src>

<mosaic_0001>
module attributes {stable_mosaic.version = 11 : i64} {
  func.func @_mlp_adapter_kernel(%arg0: i32, %arg1: i32, %arg2: memref<8x128xf32, #tpu.memory_space<vmem>>, %arg3: memref<128x128xf32, #tpu.memory_space<vmem>>, %arg4: memref<128x128xf32, #tpu.memory_space<vmem>>, %arg5: memref<1x128xf32, #tpu.memory_space<vmem>>, %arg6: memref<1x128xf32, #tpu.memory_space<vmem>>, %arg7: memref<128x128xf32, #tpu.memory_space<vmem>>, %arg8: memref<1x128xf32, #tpu.memory_space<vmem>>, %arg9: memref<1x128xf32, #tpu.memory_space<vmem>>, %arg10: memref<8x128xf32, #tpu.memory_space<vmem>>, %arg11: memref<8x128xf32, #tpu.memory_space<vmem>>) attributes {dimension_semantics = [#tpu.dimension_semantics<parallel>, #tpu.dimension_semantics<arbitrary>], iteration_bounds = array<i64: 1, 1>, scalar_prefetch = 0 : i64, scratch_operands = 1 : i64, tpu.core_type = #tpu.core_type<tc>, window_params = [{transform_indices = @transform_0, window_bounds = array<i64: 8, 128>}, {transform_indices = @transform_1, window_bounds = array<i64: 128, 128>}, {transform_indices = @transform_2, window_bounds = array<i64: 128, 128>}, {transform_indices = @transform_3, window_bounds = array<i64: 1, 128>}, {transform_indices = @transform_4, window_bounds = array<i64: 1, 128>}, {transform_indices = @transform_5, window_bounds = array<i64: 128, 128>}, {pipeline_mode = #tpu.pipeline_mode<synchronous>, transform_indices = @transform_6, window_bounds = array<i64: 1, 128>}, {pipeline_mode = #tpu.pipeline_mode<synchronous>, transform_indices = @transform_7, window_bounds = array<i64: 1, 128>}, {transform_indices = @transform_8, window_bounds = array<i64: 8, 128>}]} {
    %c0_i32 = arith.constant 0 : i32
    %0 = arith.cmpi eq, %arg1, %c0_i32 : i32
    %1 = arith.extui %0 : i1 to i32
    %c0_i32_0 = arith.constant 0 : i32
    %2 = arith.cmpi ne, %1, %c0_i32_0 : i32
    scf.if %2 {
      %cst_21 = arith.constant 0.000000e+00 : f32
      %29 = vector.broadcast %cst_21 : f32 to vector<8x128xf32>
      %c0_22 = arith.constant 0 : index
      %c0_23 = arith.constant 0 : index
      %30 = vector.load %arg11[%c0_22, %c0_23] : memref<8x128xf32, #tpu.memory_space<vmem>>, vector<8x128xf32>
      tpu.vector_store %arg11[%c0_22, %c0_23], %29 {strides = array<i32>} : memref<8x128xf32, #tpu.memory_space<vmem>>, vector<8x128xf32>,
    } else {
    }
    %c0 = arith.constant 0 : index
    %c0_1 = arith.constant 0 : index
    %3 = vector.load %arg2[%c0, %c0_1] : memref<8x128xf32, #tpu.memory_space<vmem>>, vector<8x128xf32>
    %c0_2 = arith.constant 0 : index
    %c0_3 = arith.constant 0 : index
    %4 = vector.load %arg3[%c0_2, %c0_3] : memref<128x128xf32, #tpu.memory_space<vmem>>, vector<128x128xf32>
    %cst = arith.constant dense<0.000000e+00> : vector<8x128xf32>
    %5 = tpu.matmul %3, %4, %cst {dimension_numbers = #tpu.dot_dimension_numbers<[1], [0], [0], [1], [0, 0, 1, 1], [], []>} : vector<8x128xf32>, vector<128x128xf32>, vector<8x128xf32> -> vector<8x128xf32>
    %c0_4 = arith.constant 0 : index
    %c0_5 = arith.constant 0 : index
    %6 = vector.load %arg5[%c0_4, %c0_5] : memref<1x128xf32, #tpu.memory_space<vmem>>, vector<1x128xf32>
    %7 = vector.broadcast %6 : vector<1x128xf32> to vector<8x128xf32>
    %8 = arith.addf %5, %7 : vector<8x128xf32>
    %c0_6 = arith.constant 0 : index
    %c0_7 = arith.constant 0 : index
    %9 = vector.load %arg4[%c0_6, %c0_7] : memref<128x128xf32, #tpu.memory_space<vmem>>, vector<128x128xf32>
    %cst_8 = arith.constant dense<0.000000e+00> : vector<8x128xf32>
    %10 = tpu.matmul %3, %9, %cst_8 {dimension_numbers = #tpu.dot_dimension_numbers<[1], [0], [0], [1], [0, 0, 1, 1], [], []>} : vector<8x128xf32>, vector<128x128xf32>, vector<8x128xf32> -> vector<8x128xf32>
    %c0_9 = arith.constant 0 : index
    %c0_10 = arith.constant 0 : index
    %11 = vector.load %arg6[%c0_9, %c0_10] : memref<1x128xf32, #tpu.memory_space<vmem>>, vector<1x128xf32>
    %12 = vector.broadcast %11 : vector<1x128xf32> to vector<8x128xf32>
    %13 = arith.addf %10, %12 : vector<8x128xf32>
    %14 = arith.negf %13 : vector<8x128xf32>
    %15 = math.exp %14 : vector<8x128xf32>
    %cst_11 = arith.constant 1.000000e+00 : f32
    %16 = vector.broadcast %cst_11 : f32 to vector<8x128xf32>
    %17 = arith.addf %16, %15 : vector<8x128xf32>
    %18 = arith.divf %16, %17 : vector<8x128xf32>
    %19 = arith.mulf %13, %18 : vector<8x128xf32>
    %20 = arith.mulf %8, %19 : vector<8x128xf32>
    %c0_12 = arith.constant 0 : index
    %c0_13 = arith.constant 0 : index
    %21 = vector.load %arg11[%c0_12, %c0_13] : memref<8x128xf32, #tpu.memory_space<vmem>>, vector<8x128xf32>
    %c0_14 = arith.constant 0 : index
    %c0_15 = arith.constant 0 : index
    %22 = vector.load %arg7[%c0_14, %c0_15] : memref<128x128xf32, #tpu.memory_space<vmem>>, vector<128x128xf32>
    %cst_16 = arith.constant dense<0.000000e+00> : vector<8x128xf32>
    %23 = tpu.matmul %20, %22, %cst_16 {dimension_numbers = #tpu.dot_dimension_numbers<[1], [0], [0], [1], [0, 0, 1, 1], [], []>} : vector<8x128xf32>, vector<128x128xf32>, vector<8x128xf32> -> vector<8x128xf32>
    %24 = arith.addf %21, %23 : vector<8x128xf32>
    %c0_17 = arith.constant 0 : index
    %c0_18 = arith.constant 0 : index
    %25 = vector.load %arg11[%c0_17, %c0_18] : memref<8x128xf32, #tpu.memory_space<vmem>>, vector<8x128xf32>
    tpu.vector_store %arg11[%c0_17, %c0_18], %24 {strides = array<i32>} : memref<8x128xf32, #tpu.memory_space<vmem>>, vector<8x128xf32>,
    %c0_i32_19 = arith.constant 0 : i32
    %26 = arith.cmpi eq, %arg1, %c0_i32_19 : i32
    %27 = arith.extui %26 : i1 to i32
    %c0_i32_20 = arith.constant 0 : i32
    %28 = arith.cmpi ne, %27, %c0_i32_20 : i32
    scf.if %28 {
      %c0_21 = arith.constant 0 : index
      %c0_22 = arith.constant 0 : index
      %29 = vector.load %arg11[%c0_21, %c0_22] : memref<8x128xf32, #tpu.memory_space<vmem>>, vector<8x128xf32>
      %30 = arith.addf %3, %29 : vector<8x128xf32>
      %c0_23 = arith.constant 0 : index
      %c0_24 = arith.constant 0 : index
      %31 = vector.load %arg8[%c0_23, %c0_24] : memref<1x128xf32, #tpu.memory_space<vmem>>, vector<1x128xf32>
      %32 = vector.broadcast %31 : vector<1x128xf32> to vector<8x128xf32>
      %33 = arith.addf %30, %32 : vector<8x128xf32>
      %34 = arith.mulf %33, %33 : vector<8x128xf32>
      %cst_25 = arith.constant dense<0.000000e+00> : vector<8xf32>
      %35 = vector.multi_reduction <add>, %34, %cst_25 [1] : vector<8x128xf32> to vector<8xf32>
      %36 = vector.shape_cast %35 : vector<8xf32> to vector<8x1xf32>
      %cst_26 = arith.constant 3.125000e-02 : f32
      %37 = vector.broadcast %cst_26 : f32 to vector<8x1xf32>
      %38 = arith.mulf %36, %37 : vector<8x1xf32>
      %cst_27 = arith.constant 1.000000e-16 : f32
      %39 = vector.broadcast %cst_27 : f32 to vector<8x1xf32>
      %40 = arith.maximumf %38, %39 : vector<8x1xf32>
      %41 = math.rsqrt %40 : vector<8x1xf32>
      %42 = vector.broadcast %41 : vector<8x1xf32> to vector<8x128xf32>
      %43 = arith.mulf %33, %42 : vector<8x128xf32>
      %c0_28 = arith.constant 0 : index
      %c0_29 = arith.constant 0 : index
      %44 = vector.load %arg9[%c0_28, %c0_29] : memref<1x128xf32, #tpu.memory_space<vmem>>, vector<1x128xf32>
      %45 = vector.broadcast %44 : vector<1x128xf32> to vector<8x128xf32>
      %46 = arith.mulf %43, %45 : vector<8x128xf32>
      %c0_30 = arith.constant 0 : index
      %c0_31 = arith.constant 0 : index
      %47 = vector.load %arg10[%c0_30, %c0_31] : memref<8x128xf32, #tpu.memory_space<vmem>>, vector<8x128xf32>
      tpu.vector_store %arg10[%c0_30, %c0_31], %46 {strides = array<i32>} : memref<8x128xf32, #tpu.memory_space<vmem>>, vector<8x128xf32>,
    } else {
    }
    return
  }
  func.func @transform_0(%arg0: i32, %arg1: i32) -> (i32, i32) {
    %c0_i32 = arith.constant 0 : i32
    %c0_i32_0 = arith.constant 0 : i32
    return %arg0, %c0_i32 : i32, i32
  }
  func.func @transform_1(%arg0: i32, %arg1: i32) -> (i32, i32) {
    %c0_i32 = arith.constant 0 : i32
    %c0_i32_0 = arith.constant 0 : i32
    return %c0_i32, %arg1 : i32, i32
  }
  func.func @transform_2(%arg0: i32, %arg1: i32) -> (i32, i32) {
    %c0_i32 = arith.constant 0 : i32
    %c0_i32_0 = arith.constant 0 : i32
    return %c0_i32, %arg1 : i32, i32
  }
  func.func @transform_3(%arg0: i32, %arg1: i32) -> (i32, i32) {
    %c0_i32 = arith.constant 0 : i32
    %c0_i32_0 = arith.constant 0 : i32
    return %c0_i32, %arg1 : i32, i32
  }
  func.func @transform_4(%arg0: i32, %arg1: i32) -> (i32, i32) {
    %c0_i32 = arith.constant 0 : i32
    %c0_i32_0 = arith.constant 0 : i32
    return %c0_i32, %arg1 : i32, i32
  }
  func.func @transform_5(%arg0: i32, %arg1: i32) -> (i32, i32) {
    %c0_i32 = arith.constant 0 : i32
    %c0_i32_0 = arith.constant 0 : i32
    return %arg1, %c0_i32 : i32, i32
  }
  func.func @transform_6(%arg0: i32, %arg1: i32) -> (i32, i32) {
    %c0_i32 = arith.constant 0 : i32
    %c0_i32_0 = arith.constant 0 : i32
    %c0_i32_1 = arith.constant 0 : i32
    return %c0_i32, %c0_i32_0 : i32, i32
  }
  func.func @transform_7(%arg0: i32, %arg1: i32) -> (i32, i32) {
    %c0_i32 = arith.constant 0 : i32
    %c0_i32_0 = arith.constant 0 : i32
    %c0_i32_1 = arith.constant 0 : i32
    return %c0_i32, %c0_i32_0 : i32, i32
  }
  func.func @transform_8(%arg0: i32, %arg1: i32) -> (i32, i32) {
    %c0_i32 = arith.constant 0 : i32
    %c0_i32_0 = arith.constant 0 : i32
    return %arg0, %c0_i32 : i32, i32
  }
}

</mosaic_0001>

<llo_original>
// kernel: tpu_custom_call.1
$region0: #{tpu_custom_call.1}
  #allocation0 [shape = 'u32[]', space=smem, size = 0x4, offset = 0x4, fixed_abs, tag = 'smem constant byte address 0x4 - core index']
  #allocation1 [shape = 'u32[144,128]{1,0:T(1,128)}', space=vmem, size = 0x12000, scoped, tag = 'internal scratch']
  #allocation2 [shape = 'f32[8,128]{1,0:T(8,128)}', space=vmem, size = 0x1000, scoped, tag = 'scratch operand']
  %s0 = inlined_call_operand.hbm [shape: f32[8,128], index: 0, kind: input, shape index: {}]
  %s1 = inlined_call_operand.hbm [shape: f32[128,128], index: 1, kind: input, shape index: {}]
  %s2 = inlined_call_operand.hbm [shape: f32[128,128], index: 2, kind: input, shape index: {}]
  %s3 = inlined_call_operand.vmem [shape: f32[1,128], index: 3, kind: input, shape index: {}]
  %s4 = inlined_call_operand.vmem [shape: f32[1,128], index: 4, kind: input, shape index: {}]
  %s5 = inlined_call_operand.hbm [shape: f32[128,128], index: 5, kind: input, shape index: {}]
  %s6 = inlined_call_operand.vmem [shape: f32[1,128], index: 6, kind: input, shape index: {}]
  %s7 = inlined_call_operand.vmem [shape: f32[1,128], index: 7, kind: input, shape index: {}]
  %s8 = inlined_call_operand.hbm [shape: f32[8,128], index: 8, kind: output, shape index: {}]
  %s9 = sld [smem:[#allocation0]]
  $region66: #{tpu_custom_call.1} parent=0
    _
  %s11 = ssub.s32 1, %s9
  %s12 = scalar_select 0, %s11, %s9
  $region1: #{tpu_custom_call.1} parent=0
    #allocation3 [shape = 'u8[4096]{0}', space=vmem, size = 0x1000, scoped, tag = 'input window, operand 0, single buffered']
    #allocation4 [shape = 's32[1]{0}', space=sflag, size = 0x4, scoped, tag = 'scoped memory for tpu_custom_call.1']
    #allocation5 [shape = 's32[1]{0}', space=sflag, size = 0x4, scoped, tag = 'scoped memory for tpu_custom_call.1']
    #allocation6 [shape = 'u8[65536]{0}', space=vmem, size = 0x10000, scoped, tag = 'input window, operand 1, single buffered']
    #allocation7 [shape = 's32[1]{0}', space=sflag, size = 0x4, scoped, tag = 'scoped memory for tpu_custom_call.1']
    #allocation8 [shape = 'u8[65536]{0}', space=vmem, size = 0x10000, scoped, tag = 'input window, operand 2, single buffered']
    #allocation9 [shape = 'u8[65536]{0}', space=vmem, size = 0x10000, scoped, tag = 'input window, operand 5, single buffered']
    #allocation10 [shape = 's32[1]{0}', space=sflag, size = 0x4, scoped, tag = 'scoped memory for tpu_custom_call.1']
    #allocation11 [shape = 'u8[4096]{0}', space=vmem, size = 0x1000, scoped, tag = 'output window, operand 0, single buffered']
    %13 = vsyncpa [#allocation4], 0
    %14 = vsyncpa [#allocation7], 0
    %15 = vsyncpa [#allocation10], 0
    %16 = vsyncpa [#allocation5], 0
    // Predicated region
    $region2: #{tpu_custom_call.1} parent=1 // pred_check
      _
    $region3: #{tpu_custom_call.1} parent=1 // pred_check_branch
      %18 = sbr.rel (0) target = $region5
    $region4: #{tpu_custom_call.1} parent=1 // pred_region
      %s20 = ssub.s32 128, 128
      %21 = vsyncadd [#allocation4], %s20
      %s23 = sshll.u32 [#allocation3], 4
      %s24 = int_to_ptr.vmem [resolvable:$true] %s23
      %26 = dma.hbm_to_vmem [thread:$0]  %s0, 128, %s24, [#allocation4]
    $region5: #{tpu_custom_call.1} parent=1 // pred_fallthru
      _
    // Predicated region
    $region6: #{tpu_custom_call.1} parent=1 // pred_check
      _
    $region7: #{tpu_custom_call.1} parent=1 // pred_check_branch
      %28 = sbr.rel (0) target = $region9
    $region8: #{tpu_custom_call.1} parent=1 // pred_region
      %s30 = ssub.s32 2048, 2048
      %31 = vsyncadd [#allocation7], %s30
      %s32 = sshll.u32 [#allocation6], 4
      %s33 = int_to_ptr.vmem [resolvable:$true] %s32
      %38 = dma.hbm_to_vmem [thread:$0]  %s1, 2048, %s33, [#allocation7], 128, 128, 8
    $region9: #{tpu_custom_call.1} parent=1 // pred_fallthru
      _
    // Predicated region
    $region10: #{tpu_custom_call.1} parent=1 // pred_check
      _
    $region11: #{tpu_custom_call.1} parent=1 // pred_check_branch
      %40 = sbr.rel (0) target = $region13
    $region12: #{tpu_custom_call.1} parent=1 // pred_region
      %s42 = ssub.s32 2048, 2048
      %43 = vsyncadd [#allocation7], %s42
      %s44 = sshll.u32 [#allocation8], 4
      %s45 = int_to_ptr.vmem [resolvable:$true] %s44
      %50 = dma.hbm_to_vmem [thread:$0]  %s2, 2048, %s45, [#allocation7], 128, 128, 8
    $region13: #{tpu_custom_call.1} parent=1 // pred_fallthru
      _
    // Predicated region
    $region14: #{tpu_custom_call.1} parent=1 // pred_check
      _
    $region15: #{tpu_custom_call.1} parent=1 // pred_check_branch
      %52 = sbr.rel (0) target = $region17
    $region16: #{tpu_custom_call.1} parent=1 // pred_region
      _
    $region17: #{tpu_custom_call.1} parent=1 // pred_fallthru
      _
    // Predicated region
    $region18: #{tpu_custom_call.1} parent=1 // pred_check
      _
    $region19: #{tpu_custom_call.1} parent=1 // pred_check_branch
      %54 = sbr.rel (0) target = $region21
    $region20: #{tpu_custom_call.1} parent=1 // pred_region
      _
    $region21: #{tpu_custom_call.1} parent=1 // pred_fallthru
      _
    // Predicated region
    $region22: #{tpu_custom_call.1} parent=1 // pred_check
      _
    $region23: #{tpu_custom_call.1} parent=1 // pred_check_branch
      %56 = sbr.rel (0) target = $region25
    $region24: #{tpu_custom_call.1} parent=1 // pred_region
      %s58 = ssub.s32 2048, 2048
      %59 = vsyncadd [#allocation10], %s58
      %s60 = sshll.u32 [#allocation9], 4
      %s61 = int_to_ptr.vmem [resolvable:$true] %s60
      %66 = dma.hbm_to_vmem [thread:$0]  %s5, 2048, %s61, [#allocation10], 128, 128, 8
    $region25: #{tpu_custom_call.1} parent=1 // pred_fallthru
      _
    // Predicated region
    $region26: #{tpu_custom_call.1} parent=1 // pred_check
      _
    $region27: #{tpu_custom_call.1} parent=1 // pred_check_branch
      %68 = sbr.rel (0) target = $region29
    $region28: #{tpu_custom_call.1} parent=1 // pred_region
      _
    $region29: #{tpu_custom_call.1} parent=1 // pred_fallthru
      _
    // Predicated region
    $region30: #{tpu_custom_call.1} parent=1 // pred_check
      _
    $region31: #{tpu_custom_call.1} parent=1 // pred_check_branch
      %70 = sbr.rel (0) target = $region33
    $region32: #{tpu_custom_call.1} parent=1 // pred_region
      _
    $region33: #{tpu_custom_call.1} parent=1 // pred_fallthru
      _
    // Predicated region
    $region34: #{tpu_custom_call.1} parent=1 // pred_check
      _
    $region35: #{tpu_custom_call.1} parent=1 // pred_check_branch
      %72 = sbr.rel (0) target = $region37
    $region36: #{tpu_custom_call.1} parent=1 // pred_region
      %73 = dma.done [#allocation4], 128
    $region37: #{tpu_custom_call.1} parent=1 // pred_fallthru
      _
    // Predicated region
    $region38: #{tpu_custom_call.1} parent=1 // pred_check
      _
    $region39: #{tpu_custom_call.1} parent=1 // pred_check_branch
      %75 = sbr.rel (0) target = $region41
    $region40: #{tpu_custom_call.1} parent=1 // pred_region
      %76 = dma.done [#allocation7], 2048
    $region41: #{tpu_custom_call.1} parent=1 // pred_fallthru
      _
    // Predicated region
    $region42: #{tpu_custom_call.1} parent=1 // pred_check
      _
    $region43: #{tpu_custom_call.1} parent=1 // pred_check_branch
      %78 = sbr.rel (0) target = $region45
    $region44: #{tpu_custom_call.1} parent=1 // pred_region
      %79 = dma.done [#allocation7], 2048
    $region45: #{tpu_custom_call.1} parent=1 // pred_fallthru
      _
    // Predicated region
    $region46: #{tpu_custom_call.1} parent=1 // pred_check
      _
    $region47: #{tpu_custom_call.1} parent=1 // pred_check_branch
      %81 = sbr.rel (0) target = $region49
    $region48: #{tpu_custom_call.1} parent=1 // pred_region
      %82 = dma.done [#allocation10], 2048
    $region49: #{tpu_custom_call.1} parent=1 // pred_fallthru
      _
    %p83 = scmp.eq.s32.totalorder 0, 0
    // Predicated region
    $region50: #{tpu_custom_call.1} parent=1 // pred_check
      %p84 = pneg %p83
    $region51: #{tpu_custom_call.1} parent=1 // pred_check_branch
      %86 = sbr.rel (%p84) target = $region53
    $region52: #{tpu_custom_call.1} parent=1 // pred_region
      %87 = vst [vmem:[#allocation2] sm:$0xff] 0.0
    $region53: #{tpu_custom_call.1} parent=1 // pred_fallthru
      _
    %v88 = vld [vmem:[#allocation3] sm:$0xff]
    %v89 = vld [vmem:[#allocation6] sm:$0xff]
    %v90 = vld [vmem:[#allocation6 + $0x8] sm:$0xff]
    %v91 = vld [vmem:[#allocation6 + $0x10] sm:$0xff]
    %v92 = vld [vmem:[#allocation6 + $0x18] sm:$0xff]
    %v93 = vld [vmem:[#allocation6 + $0x20] sm:$0xff]
    %v94 = vld [vmem:[#allocation6 + $0x28] sm:$0xff]
    %v95 = vld [vmem:[#allocation6 + $0x30] sm:$0xff]
    %v96 = vld [vmem:[#allocation6 + $0x38] sm:$0xff]
    %v97 = vld [vmem:[#allocation6 + $0x40] sm:$0xff]
    %v98 = vld [vmem:[#allocation6 + $0x48] sm:$0xff]
    %v99 = vld [vmem:[#allocation6 + $0x50] sm:$0xff]
    %v100 = vld [vmem:[#allocation6 + $0x58] sm:$0xff]
    %v101 = vld [vmem:[#allocation6 + $0x60] sm:$0xff]
    %v102 = vld [vmem:[#allocation6 + $0x68] sm:$0xff]
    %v103 = vld [vmem:[#allocation6 + $0x70] sm:$0xff]
    %v104 = vld [vmem:[#allocation6 + $0x78] sm:$0xff]
    %v105 = vld [vmem:[%s3] sm:$0x1]
    %v107 = vlaneseq
    %v108 = vshrl.u32 %v107, 7
    %v109 = vsub.s32 0, %v108
    %v110 = vrot.slane %v105, %v109
    %112 = vmatprep.subr.mxu0 0.0
    %113 = vmatpush1.msra.mxu0 %v104
    %114 = vmatprep.subr.mxu0 0.0
    %115 = vmatpush1.msra.mxu0 %v103
    %116 = vmatprep.subr.mxu0 0.0
    %117 = vmatpush1.msra.mxu0 %v102
    %118 = vmatprep.subr.mxu0 0.0
    %119 = vmatpush1.msra.mxu0 %v101
    %120 = vmatprep.subr.mxu0 0.0
    %121 = vmatpush1.msra.mxu0 %v100
    %122 = vmatprep.subr.mxu0 0.0
    %123 = vmatpush1.msra.mxu0 %v99
    %124 = vmatprep.subr.mxu0 0.0
    %125 = vmatpush1.msra.mxu0 %v98
    %126 = vmatprep.subr.mxu0 0.0
    %127 = vmatpush1.msra.mxu0 %v97
    %128 = vmatprep.subr.mxu0 0.0
    %129 = vmatpush1.msra.mxu0 %v96
    %130 = vmatprep.subr.mxu0 0.0
    %131 = vmatpush1.msra.mxu0 %v95
    %132 = vmatprep.subr.mxu0 0.0
    %133 = vmatpush1.msra.mxu0 %v94
    %134 = vmatprep.subr.mxu0 0.0
    %135 = vmatpush1.msra.mxu0 %v93
    %136 = vmatprep.subr.mxu0 0.0
    %137 = vmatpush1.msra.mxu0 %v92
    %138 = vmatprep.subr.mxu0 0.0
    %139 = vmatpush1.msra.mxu0 %v91
    %140 = vmatprep.subr.mxu0 0.0
    %141 = vmatpush1.msra.mxu0 %v90
    %142 = vmatprep.subr.mxu0 0.0
    %143 = vmatpush1.msra.mxu0 %v89
    %144 = vmatprep.subr.mxu0 0.0
    %145 = vmatpush2.msra.mxu0 0.0
    %146 = vmatprep.subr.mxu0 0.0
    %147 = vmatpush2.msra.mxu0 0.0
    %148 = vmatprep.subr.mxu0 0.0
    %149 = vmatpush2.msra.mxu0 0.0
    %150 = vmatprep.subr.mxu0 0.0
    %151 = vmatpush2.msra.mxu0 0.0
    %152 = vmatprep.subr.mxu0 0.0
    %153 = vmatpush2.msra.mxu0 0.0
    %154 = vmatprep.subr.mxu0 0.0
    %155 = vmatpush2.msra.mxu0 0.0
    %156 = vmatprep.subr.mxu0 0.0
    %157 = vmatpush2.msra.mxu0 0.0
    %158 = vmatprep.subr.mxu0 0.0
    %159 = vmatpush2.msra.mxu0 0.0
    %160 = vmatprep.subr.mxu0 0.0
    %161 = vmatpush2.msra.mxu0 0.0
    %162 = vmatprep.subr.mxu0 0.0
    %163 = vmatpush2.msra.mxu0 0.0
    %164 = vmatprep.subr.mxu0 0.0
    %165 = vmatpush2.msra.mxu0 0.0
    %166 = vmatprep.subr.mxu0 0.0
    %167 = vmatpush2.msra.mxu0 0.0
    %168 = vmatprep.subr.mxu0 0.0
    %169 = vmatpush2.msra.mxu0 0.0
    %170 = vmatprep.subr.mxu0 0.0
    %171 = vmatpush2.msra.mxu0 0.0
    %172 = vmatprep.subr.mxu0 0.0
    %173 = vmatpush2.msra.mxu0 0.0
    %174 = vmatprep.subr.mxu0 0.0
    %175 = vmatpush2.msra.mxu0 0.0
    %176 = vmatprep.mubr.f32.mxu0 0.0
    %177 = vmatmul.mubr.f32.gmra.mxu0 %v88
    %v178 = vpop.f32.mrf.mxu0
    %v179 = vadd.f32 %v110, %v178
    %v180 = vpop.f32.mrf.mxu0
    %181 = vdwg.mxu0
    %v182 = vld [vmem:[#allocation8] sm:$0xff]
    %v183 = vld [vmem:[#allocation8 + $0x8] sm:$0xff]
    %v184 = vld [vmem:[#allocation8 + $0x10] sm:$0xff]
    %v185 = vld [vmem:[#allocation8 + $0x18] sm:$0xff]
    %v186 = vld [vmem:[#allocation8 + $0x20] sm:$0xff]
    %v187 = vld [vmem:[#allocation8 + $0x28] sm:$0xff]
    %v188 = vld [vmem:[#allocation8 + $0x30] sm:$0xff]
    %v189 = vld [vmem:[#allocation8 + $0x38] sm:$0xff]
    %v190 = vld [vmem:[#allocation8 + $0x40] sm:$0xff]
    %v191 = vld [vmem:[#allocation8 + $0x48] sm:$0xff]
    %v192 = vld [vmem:[#allocation8 + $0x50] sm:$0xff]
    %v193 = vld [vmem:[#allocation8 + $0x58] sm:$0xff]
    %v194 = vld [vmem:[#allocation8 + $0x60] sm:$0xff]
    %v195 = vld [vmem:[#allocation8 + $0x68] sm:$0xff]
    %v196 = vld [vmem:[#allocation8 + $0x70] sm:$0xff]
    %v197 = vld [vmem:[#allocation8 + $0x78] sm:$0xff]
    %v198 = vld [vmem:[%s4] sm:$0x1]
    %v200 = vlaneseq
    %v201 = vshrl.u32 %v200, 7
    %v202 = vsub.s32 0, %v201
    %v203 = vrot.slane %v198, %v202
    %205 = vmatprep.subr.mxu0 0.0
    %206 = vmatpush1.msra.mxu0 %v197
    %207 = vmatprep.subr.mxu0 0.0
    %208 = vmatpush1.msra.mxu0 %v196
    %209 = vmatprep.subr.mxu0 0.0
    %210 = vmatpush1.msra.mxu0 %v195
    %211 = vmatprep.subr.mxu0 0.0
    %212 = vmatpush1.msra.mxu0 %v194
    %213 = vmatprep.subr.mxu0 0.0
    %214 = vmatpush1.msra.mxu0 %v193
    %215 = vmatprep.subr.mxu0 0.0
    %216 = vmatpush1.msra.mxu0 %v192
    %217 = vmatprep.subr.mxu0 0.0
    %218 = vmatpush1.msra.mxu0 %v191
    %219 = vmatprep.subr.mxu0 0.0
    %220 = vmatpush1.msra.mxu0 %v190
    %221 = vmatprep.subr.mxu0 0.0
    %222 = vmatpush1.msra.mxu0 %v189
    %223 = vmatprep.subr.mxu0 0.0
    %224 = vmatpush1.msra.mxu0 %v188
    %225 = vmatprep.subr.mxu0 0.0
    %226 = vmatpush1.msra.mxu0 %v187
    %227 = vmatprep.subr.mxu0 0.0
    %228 = vmatpush1.msra.mxu0 %v186
    %229 = vmatprep.subr.mxu0 0.0
    %230 = vmatpush1.msra.mxu0 %v185
    %231 = vmatprep.subr.mxu0 0.0
    %232 = vmatpush1.msra.mxu0 %v184
    %233 = vmatprep.subr.mxu0 0.0
    %234 = vmatpush1.msra.mxu0 %v183
    %235 = vmatprep.subr.mxu0 0.0
    %236 = vmatpush1.msra.mxu0 %v182
    %237 = vmatprep.subr.mxu0 0.0
    %238 = vmatpush2.msra.mxu0 0.0
    %239 = vmatprep.subr.mxu0 0.0
    %240 = vmatpush2.msra.mxu0 0.0
    %241 = vmatprep.subr.mxu0 0.0
    %242 = vmatpush2.msra.mxu0 0.0
    %243 = vmatprep.subr.mxu0 0.0
    %244 = vmatpush2.msra.mxu0 0.0
    %245 = vmatprep.subr.mxu0 0.0
    %246 = vmatpush2.msra.mxu0 0.0
    %247 = vmatprep.subr.mxu0 0.0
    %248 = vmatpush2.msra.mxu0 0.0
    %249 = vmatprep.subr.mxu0 0.0
    %250 = vmatpush2.msra.mxu0 0.0
    %251 = vmatprep.subr.mxu0 0.0
    %252 = vmatpush2.msra.mxu0 0.0
    %253 = vmatprep.subr.mxu0 0.0
    %254 = vmatpush2.msra.mxu0 0.0
    %255 = vmatprep.subr.mxu0 0.0
    %256 = vmatpush2.msra.mxu0 0.0
    %257 = vmatprep.subr.mxu0 0.0
    %258 = vmatpush2.msra.mxu0 0.0
    %259 = vmatprep.subr.mxu0 0.0
    %260 = vmatpush2.msra.mxu0 0.0
    %261 = vmatprep.subr.mxu0 0.0
    %262 = vmatpush2.msra.mxu0 0.0
    %263 = vmatprep.subr.mxu0 0.0
    %264 = vmatpush2.msra.mxu0 0.0
    %265 = vmatprep.subr.mxu0 0.0
    %266 = vmatpush2.msra.mxu0 0.0
    %267 = vmatprep.subr.mxu0 0.0
    %268 = vmatpush2.msra.mxu0 0.0
    %269 = vmatprep.mubr.f32.mxu0 0.0
    %270 = vmatmul.mubr.f32.gmra.mxu0 %v88
    %v271 = vpop.f32.mrf.mxu0
    %v272 = vadd.f32 %v203, %v271
    %v273 = vpop.f32.mrf.mxu0
    %274 = vdwg.mxu0
    %v275 = vxor.u32 %v272, 2147483648
    %v276 = vmul.f32 %v275, 1.442695
    %v277 = vpow.pop %v276
    %v278 = vadd.f32 %v277, 1.0
    %v279 = vrcp.pop %v278
    %v280 = vmul.f32 1.0, %v279
    %v281 = vmul.f32 %v272, %v280
    %v282 = vmul.f32 %v179, %v281
    %v283 = vld [vmem:[#allocation2] sm:$0xff]
    %v284 = vld [vmem:[#allocation9] sm:$0xff]
    %v285 = vld [vmem:[#allocation9 + $0x8] sm:$0xff]
    %v286 = vld [vmem:[#allocation9 + $0x10] sm:$0xff]
    %v287 = vld [vmem:[#allocation9 + $0x18] sm:$0xff]
    %v288 = vld [vmem:[#allocation9 + $0x20] sm:$0xff]
    %v289 = vld [vmem:[#allocation9 + $0x28] sm:$0xff]
    %v290 = vld [vmem:[#allocation9 + $0x30] sm:$0xff]
    %v291 = vld [vmem:[#allocation9 + $0x38] sm:$0xff]
    %v292 = vld [vmem:[#allocation9 + $0x40] sm:$0xff]
    %v293 = vld [vmem:[#allocation9 + $0x48] sm:$0xff]
    %v294 = vld [vmem:[#allocation9 + $0x50] sm:$0xff]
    %v295 = vld [vmem:[#allocation9 + $0x58] sm:$0xff]
    %v296 = vld [vmem:[#allocation9 + $0x60] sm:$0xff]
    %v297 = vld [vmem:[#allocation9 + $0x68] sm:$0xff]
    %v298 = vld [vmem:[#allocation9 + $0x70] sm:$0xff]
    %v299 = vld [vmem:[#allocation9 + $0x78] sm:$0xff]
    %300 = vmatprep.subr.mxu0 0.0
    %301 = vmatpush1.msra.mxu0 %v299
    %302 = vmatprep.subr.mxu0 0.0
    %303 = vmatpush1.msra.mxu0 %v298
    %304 = vmatprep.subr.mxu0 0.0
    %305 = vmatpush1.msra.mxu0 %v297
    %306 = vmatprep.subr.mxu0 0.0
    %307 = vmatpush1.msra.mxu0 %v296
    %308 = vmatprep.subr.mxu0 0.0
    %309 = vmatpush1.msra.mxu0 %v295
    %310 = vmatprep.subr.mxu0 0.0
    %311 = vmatpush1.msra.mxu0 %v294
    %312 = vmatprep.subr.mxu0 0.0
    %313 = vmatpush1.msra.mxu0 %v293
    %314 = vmatprep.subr.mxu0 0.0
    %315 = vmatpush1.msra.mxu0 %v292
    %316 = vmatprep.subr.mxu0 0.0
    %317 = vmatpush1.msra.mxu0 %v291
    %318 = vmatprep.subr.mxu0 0.0
    %319 = vmatpush1.msra.mxu0 %v290
    %320 = vmatprep.subr.mxu0 0.0
    %321 = vmatpush1.msra.mxu0 %v289
    %322 = vmatprep.subr.mxu0 0.0
    %323 = vmatpush1.msra.mxu0 %v288
    %324 = vmatprep.subr.mxu0 0.0
    %325 = vmatpush1.msra.mxu0 %v287
    %326 = vmatprep.subr.mxu0 0.0
    %327 = vmatpush1.msra.mxu0 %v286
    %328 = vmatprep.subr.mxu0 0.0
    %329 = vmatpush1.msra.mxu0 %v285
    %330 = vmatprep.subr.mxu0 0.0
    %331 = vmatpush1.msra.mxu0 %v284
    %332 = vmatprep.subr.mxu0 0.0
    %333 = vmatpush2.msra.mxu0 0.0
    %334 = vmatprep.subr.mxu0 0.0
    %335 = vmatpush2.msra.mxu0 0.0
    %336 = vmatprep.subr.mxu0 0.0
    %337 = vmatpush2.msra.mxu0 0.0
    %338 = vmatprep.subr.mxu0 0.0
    %339 = vmatpush2.msra.mxu0 0.0
    %340 = vmatprep.subr.mxu0 0.0
    %341 = vmatpush2.msra.mxu0 0.0
    %342 = vmatprep.subr.mxu0 0.0
    %343 = vmatpush2.msra.mxu0 0.0
    %344 = vmatprep.subr.mxu0 0.0
    %345 = vmatpush2.msra.mxu0 0.0
    %346 = vmatprep.subr.mxu0 0.0
    %347 = vmatpush2.msra.mxu0 0.0
    %348 = vmatprep.subr.mxu0 0.0
    %349 = vmatpush2.msra.mxu0 0.0
    %350 = vmatprep.subr.mxu0 0.0
    %351 = vmatpush2.msra.mxu0 0.0
    %352 = vmatprep.subr.mxu0 0.0
    %353 = vmatpush2.msra.mxu0 0.0
    %354 = vmatprep.subr.mxu0 0.0
    %355 = vmatpush2.msra.mxu0 0.0
    %356 = vmatprep.subr.mxu0 0.0
    %357 = vmatpush2.msra.mxu0 0.0
    %358 = vmatprep.subr.mxu0 0.0
    %359 = vmatpush2.msra.mxu0 0.0
    %360 = vmatprep.subr.mxu0 0.0
    %361 = vmatpush2.msra.mxu0 0.0
    %362 = vmatprep.subr.mxu0 0.0
    %363 = vmatpush2.msra.mxu0 0.0
    %364 = vmatprep.mubr.f32.mxu0 0.0
    %365 = vmatmul.mubr.f32.gmra.mxu0 %v282
    %v366 = vpop.f32.mrf.mxu0
    %v367 = vadd.f32 0.0, %v366
    %v368 = vpop.f32.mrf.mxu0
    %369 = vdwg.mxu0
    %v370 = vadd.f32 %v283, %v367
    %371 = vst [vmem:[#allocation2] sm:$0xff] %v370
    // Predicated region
    $region54: #{tpu_custom_call.1} parent=1 // pred_check
      %p372 = pneg %p83
    $region55: #{tpu_custom_call.1} parent=1 // pred_check_branch
      %374 = sbr.rel (%p372) target = $region57
    $region56: #{tpu_custom_call.1} parent=1 // pred_region
      %v375 = vld [vmem:[#allocation2] sm:$0xff]
      %v376 = vadd.f32 %v88, %v375
      %v377 = vld [vmem:[%s6] sm:$0x1]
      %v379 = vlaneseq
      %v380 = vshrl.u32 %v379, 7
      %v381 = vsub.s32 0, %v380
      %v382 = vrot.slane %v377, %v381
      %v384 = vadd.f32 %v376, %v382
      %v385 = vmul.f32 %v384, %v384
      %386 = vadd.xlane.f32.xlu0 %v385
      %v387 = vpop.xlane.xlu0 %386
      %v388 = vmul.f32 %v387, 0.03125
      %v389 = vmax.f32 %v388, 1e-16
      %v390 = vrsqrt.pop %v389
      %v391 = vmul.f32 %v384, %v390
      %v392 = vld [vmem:[%s7] sm:$0x1]
      %v394 = vlaneseq
      %v395 = vshrl.u32 %v394, 7
      %v396 = vsub.s32 0, %v395
      %v397 = vrot.slane %v392, %v396
      %v399 = vmul.f32 %v391, %v397
      %400 = vst [vmem:[#allocation11] sm:$0xff] %v399
    $region57: #{tpu_custom_call.1} parent=1 // pred_fallthru
      _
    // Predicated region
    $region58: #{tpu_custom_call.1} parent=1 // pred_check
      _
    $region59: #{tpu_custom_call.1} parent=1 // pred_check_branch
      %402 = sbr.rel (0) target = $region61
    $region60: #{tpu_custom_call.1} parent=1 // pred_region
      %s404 = ssub.s32 128, 128
      %405 = vsyncadd [#allocation5], %s404
      %s407 = sshll.u32 [#allocation11], 4
      %s408 = int_to_ptr.vmem [resolvable:$true] %s407
      %410 = dma.vmem_to_hbm [thread:$0]  %s408, 128, %s8, [#allocation5]
    $region61: #{tpu_custom_call.1} parent=1 // pred_fallthru
      _
    // Predicated region
    $region62: #{tpu_custom_call.1} parent=1 // pred_check
      _
    $region63: #{tpu_custom_call.1} parent=1 // pred_check_branch
      %412 = sbr.rel (0) target = $region65
    $region64: #{tpu_custom_call.1} parent=1 // pred_region
      %413 = dma.done [#allocation5], 128
    $region65: #{tpu_custom_call.1} parent=1 // pred_fallthru
      _
    %414 = vsyncpa [#allocation4], 1
    %415 = vsyncpa [#allocation7], 1
    %416 = vsyncpa [#allocation10], 1
    %417 = vsyncpa [#allocation5], 1

</llo_original>
